<compile_context>
chip_gen: v7x
topology: tpu7x:2x2x1
jax: 0.10.0
libtpu: 0.0.40
codegen_flags: <defaults>
</compile_context>

<pallas_src>
import numpy as np
import jax
import jax.numpy as jnp
from jax.experimental import pallas as pl
from jax.experimental.pallas import tpu as pltpu


# ----------------------------- Pallas kernel -----------------------------

def _linear_kernel(x_ref, w_ref, b_ref, o_ref):
    # One (tm, Din) tile of flattened patches times the full (Din, Dout) weight.
    acc = jnp.dot(x_ref[...], w_ref[...], preferred_element_type=jnp.float32)
    o_ref[...] = (acc + b_ref[...].astype(jnp.float32)).astype(o_ref.dtype)


# ----------------------------- sizing helpers ------------------------------

def _round_up(x, m):
    return ((x + m - 1) // m) * m


def _vmem_budget():
    """Generation-aware (vmem_limit_bytes, tile budget) in bytes."""
    try:
        cap = int(pltpu.get_tpu_info().vmem_capacity_bytes)
    except Exception:  # interpret mode / unknown backend -> conservative
        cap = 64 * 1024 * 1024
    # v7x (64 MiB physical): limit 40 MiB, tile budget 32 MiB.
    # v5e/v6e (128 MiB physical): limit 80 MiB, tile budget 72 MiB.
    limit = min(cap * 5 // 8, 96 * 1024 * 1024)
    budget = max(limit - 8 * 1024 * 1024, 16 * 1024 * 1024)
    return int(limit), int(budget)


def _tm_cap(Din, Dout, x_bytes, out_bytes, w_bytes, b_bytes, budget,
            max_tm=1024):
    """Largest M tile (multiple of 8) that fits the VMEM budget."""
    # Weight + bias are grid-invariant and single-buffered (pl.Buffered(1)).
    fixed = Din * Dout * w_bytes + Dout * b_bytes
    # x tile + out tile double-buffered, plus the (tm, Dout) f32 accumulator.
    per_row = 2 * Din * x_bytes + 2 * Dout * out_bytes + Dout * 4
    cap = (budget - fixed) // per_row
    cap = int(max(8, min(cap, max_tm)))
    return (cap // 8) * 8


def _tile_and_grid(M, tm_cap):
    """Largest tile within the cap, even grid for v7x megacore, no padding."""
    if M <= 8:
        return int(M), 1
    tm_cap = max(8, min(tm_cap, _round_up(M, 8)))
    grid_m = pl.cdiv(M, tm_cap)
    if grid_m % 2:
        grid_m += 1  # even split across v7x's two TensorCores
    tm = min(_round_up(pl.cdiv(M, grid_m), 8), tm_cap)
    return int(tm), int(pl.cdiv(M, tm))


def _spec(block_shape, index_map, buffers=None):
    """BlockSpec with optional explicit buffer count (graceful fallback)."""
    if buffers is not None:
        try:
            return pl.BlockSpec(block_shape, index_map,
                                pipeline_mode=pl.Buffered(buffers))
        except TypeError:  # older jax without pipeline_mode
            pass
    return pl.BlockSpec(block_shape, index_map)


# ----------------------------- linear embed --------------------------------

def linear_embed_pallas(x2d, w, b, *, tm=None, out_dtype=None, x_buffers=None):
    """y = x2d @ w + b on the MXU.  x2d: (M, Din); w: (Din, Dout); b: (Dout,).

    For the narrow-dtype path, store w/b in bf16 ahead of time and pass bf16
    activations; accumulation stays f32 inside the kernel.
    """
    M, Din = x2d.shape
    Dout = w.shape[1]
    out_dtype = jnp.dtype(out_dtype or x2d.dtype)
    if x2d.dtype != w.dtype:
        x2d = x2d.astype(w.dtype)  # cast activations, never the stored weight

    # Lane-dense output: pad the weight/bias columns to a multiple of 128 once
    # and slice the output back (no-op when Dout is already aligned).
    Dout_p = _round_up(Dout, 128)
    if Dout_p != Dout:
        w = jnp.pad(w, ((0, 0), (0, Dout_p - Dout)))
        b = jnp.pad(b, (0, Dout_p - Dout))
    # TODO(synk): Din (= pt*ph*pw*C) is left unpadded; pad x/w rows as well if
    # the real model's Din is far from a multiple of 128.

    vmem_limit, vmem_budget = _vmem_budget()
    if tm is None:
        tm_cap = _tm_cap(Din, Dout_p, x2d.dtype.itemsize, out_dtype.itemsize,
                         w.dtype.itemsize, b.dtype.itemsize, vmem_budget)
    else:
        tm_cap = tm
    tm, grid_m = _tile_and_grid(M, tm_cap)

    cost = pl.CostEstimate(
        flops=2 * M * Din * Dout_p,
        transcendentals=0,
        bytes_accessed=(M * Din * x2d.dtype.itemsize
                        + Din * Dout_p * w.dtype.itemsize
                        + M * Dout_p * out_dtype.itemsize
                        + Dout_p * b.dtype.itemsize),
    )

    out = pl.pallas_call(
        _linear_kernel,
        out_shape=jax.ShapeDtypeStruct((M, Dout_p), out_dtype),
        grid_spec=pltpu.PrefetchScalarGridSpec(
            num_scalar_prefetch=0,
            grid=(grid_m,),
            in_specs=[
                # patch-row tile (double-buffered by default; bump x_buffers=3
                # only if a profile shows exposed DMA at step boundaries)
                _spec((tm, Din), lambda i: (i, 0), buffers=x_buffers),
                # full weight, grid-invariant -> single-buffered
                _spec((Din, Dout_p), lambda i: (0, 0), buffers=1),
                # bias row, grid-invariant -> single-buffered
                _spec((1, Dout_p), lambda i: (0, 0), buffers=1),
            ],
            out_specs=pl.BlockSpec((tm, Dout_p), lambda i: (i, 0)),
        ),
        compiler_params=pltpu.CompilerParams(
            dimension_semantics=("parallel",),
            vmem_limit_bytes=vmem_limit,
        ),
        cost_estimate=cost,
    )(x2d, w, b.reshape(1, Dout_p))

    return out[:, :Dout] if Dout_p != Dout else out


# ----------------------------- Patchify glue -------------------------------

def patchify(x, patch_size):
    """(B, T, C, H, W) -> (B, N, pt*ph*pw*C); flatten order (pt, ph, pw, C)
    matching Patchify(squeeze_channel_dim=True).  One XLA transpose pass."""
    pt, ph, pw = patch_size
    B, T, C, H, W = x.shape
    assert T % pt == 0 and H % ph == 0 and W % pw == 0
    x = x.reshape(B, T // pt, pt, C, H // ph, ph, W // pw, pw)
    x = x.transpose(0, 1, 4, 6, 2, 5, 7, 3)  # (B, t, h, w, pt, ph, pw, C)
    return x.reshape(B, (T // pt) * (H // ph) * (W // pw), pt * ph * pw * C)


def linear_patch_embed(x, w, b, patch_size, *, out_dtype=None):
    """Forward pass of LinearPatchEmbed (split_time=False path)."""
    patches = patchify(x, patch_size)  # (B, N, Din), materialized once by XLA
    B, N, Din = patches.shape
    y = linear_embed_pallas(patches.reshape(B * N, Din), w, b,
                            out_dtype=out_dtype)
    return y.reshape(B, N, w.shape[1])
    # TODO(synk): split_time=True (x.split_by_time) depends on unprovided
    # Patchify base-class internals; only the default path is implemented.


# --------------------------------- main -------------------------------------

if __name__ == "__main__":
    patch_size = (1, 8, 8)
    input_dim = 3                                # channels
    B, T, H, W = 2, 2, 32, 32
    Din = input_dim * int(np.prod(patch_size))   # 192
    Dout = 128                                   # output_dim of nn.Linear

    key = jax.random.PRNGKey(0)
    kx, kw, kb = jax.random.split(key, 3)

    x = jax.random.normal(kx, (B, T, input_dim, H, W), dtype=jnp.float32)
    # Synthetic parameters (Linear: weight (Din, Dout) = W.T, bias (Dout,))
    bound = 1.0 / np.sqrt(Din)
    w = jax.random.uniform(kw, (Din, Dout), minval=-bound, maxval=bound,
                           dtype=jnp.float32)
    b = jax.random.uniform(kb, (Dout,), minval=-bound, maxval=bound,
                           dtype=jnp.float32)

    fwd = jax.jit(lambda x, w, b: linear_patch_embed(x, w, b, patch_size))
    y = jax.block_until_ready(fwd(x, w, b))

    n_patches = (T // patch_size[0]) * (H // patch_size[1]) * (W // patch_size[2])
    assert y.shape == (B, n_patches, Dout)

    # Reference check (pure JAX), f32 path.
    ref = patchify(x, patch_size) @ w + b
    np.testing.assert_allclose(np.asarray(y), np.asarray(ref),
                               rtol=1e-5, atol=1e-5)

    # Narrow-dtype path: params stored in bf16 once; bf16 activations/output,
    # f32 MXU accumulation inside the kernel.  Loose tolerance vs. f32 ref.
    w_bf, b_bf = w.astype(jnp.bfloat16), b.astype(jnp.bfloat16)
    fwd_bf = jax.jit(lambda x, w, b: linear_patch_embed(
        x.astype(jnp.bfloat16), w, b, patch_size))
    y_bf = jax.block_until_ready(fwd_bf(x, w_bf, b_bf))
    np.testing.assert_allclose(np.asarray(y_bf.astype(jnp.float32)),
                               np.asarray(ref), rtol=5e-2, atol=5e-2)

    print("KERNEL_OK")
</pallas_src>

<mosaic_0001>
module attributes {stable_mosaic.version = 11 : i64} {
  func.func @_linear_kernel(%arg0: i32, %arg1: memref<32x192xf32, #tpu.memory_space<vmem>>, %arg2: memref<192x128xf32, #tpu.memory_space<vmem>>, %arg3: memref<1x128xf32, #tpu.memory_space<vmem>>, %arg4: memref<32x128xf32, #tpu.memory_space<vmem>>) attributes {dimension_semantics = [#tpu.dimension_semantics<parallel>], iteration_bounds = array<i64: 2>, scalar_prefetch = 0 : i64, scratch_operands = 0 : i64, tpu.core_type = #tpu.core_type<tc>, window_params = [{transform_indices = @transform_0, window_bounds = array<i64: 32, 192>}, {pipeline_mode = #tpu.pipeline_mode<synchronous>, transform_indices = @transform_1, window_bounds = array<i64: 192, 128>}, {pipeline_mode = #tpu.pipeline_mode<synchronous>, transform_indices = @transform_2, window_bounds = array<i64: 1, 128>}, {transform_indices = @transform_3, window_bounds = array<i64: 32, 128>}]} {
    %c0 = arith.constant 0 : index
    %c0_0 = arith.constant 0 : index
    %0 = vector.load %arg1[%c0, %c0_0] : memref<32x192xf32, #tpu.memory_space<vmem>>, vector<32x192xf32>
    %c0_1 = arith.constant 0 : index
    %c0_2 = arith.constant 0 : index
    %1 = vector.load %arg2[%c0_1, %c0_2] : memref<192x128xf32, #tpu.memory_space<vmem>>, vector<192x128xf32>
    %cst = arith.constant dense<0.000000e+00> : vector<32x128xf32>
    %2 = tpu.matmul %0, %1, %cst {dimension_numbers = #tpu.dot_dimension_numbers<[1], [0], [0], [1], [0, 0, 1, 1], [], []>} : vector<32x192xf32>, vector<192x128xf32>, vector<32x128xf32> -> vector<32x128xf32>
    %c0_3 = arith.constant 0 : index
    %c0_4 = arith.constant 0 : index
    %3 = vector.load %arg3[%c0_3, %c0_4] : memref<1x128xf32, #tpu.memory_space<vmem>>, vector<1x128xf32>
    %4 = vector.broadcast %3 : vector<1x128xf32> to vector<32x128xf32>
    %5 = arith.addf %2, %4 : vector<32x128xf32>
    %c0_5 = arith.constant 0 : index
    %c0_6 = arith.constant 0 : index
    %6 = vector.load %arg4[%c0_5, %c0_6] : memref<32x128xf32, #tpu.memory_space<vmem>>, vector<32x128xf32>
    tpu.vector_store %arg4[%c0_5, %c0_6], %5 {strides = array<i32>} : memref<32x128xf32, #tpu.memory_space<vmem>>, vector<32x128xf32>,
    return
  }
  func.func @transform_0(%arg0: i32) -> (i32, i32) {
    %c0_i32 = arith.constant 0 : i32
    %c0_i32_0 = arith.constant 0 : i32
    return %arg0, %c0_i32 : i32, i32
  }
  func.func @transform_1(%arg0: i32) -> (i32, i32) {
    %c0_i32 = arith.constant 0 : i32
    %c0_i32_0 = arith.constant 0 : i32
    %c0_i32_1 = arith.constant 0 : i32
    return %c0_i32, %c0_i32_0 : i32, i32
  }
  func.func @transform_2(%arg0: i32) -> (i32, i32) {
    %c0_i32 = arith.constant 0 : i32
    %c0_i32_0 = arith.constant 0 : i32
    %c0_i32_1 = arith.constant 0 : i32
    return %c0_i32, %c0_i32_0 : i32, i32
  }
  func.func @transform_3(%arg0: i32) -> (i32, i32) {
    %c0_i32 = arith.constant 0 : i32
    %c0_i32_0 = arith.constant 0 : i32
    return %arg0, %c0_i32 : i32, i32
  }
}

</mosaic_0001>

<llo_original>
// kernel: _lambda_.1
$region0: #{_lambda_.1}
  #allocation0 [shape = 'u32[]', space=smem, size = 0x4, offset = 0x4, fixed_abs, tag = 'smem constant byte address 0x4 - core index']
  #allocation1 [shape = 'u32[144,128]{1,0:T(1,128)}', space=vmem, size = 0x12000, scoped, tag = 'internal scratch']
  %s0 = inlined_call_operand.vmem [shape: f32[64,192], index: 0, kind: input, shape index: {}]
  %s1 = inlined_call_operand.vmem [shape: f32[192,128], index: 1, kind: input, shape index: {}]
  %s2 = inlined_call_operand.vmem [shape: f32[1,128], index: 2, kind: input, shape index: {}]
  %s3 = inlined_call_operand.hbm [shape: f32[64,128], index: 3, kind: output, shape index: {}]
  %s4 = sld [smem:[#allocation0]]
  $region45: #{_lambda_.1} parent=0
    _
  %s6 = ssub.s32 1, %s4
  %s7 = scalar_select 0, %s6, %s4
  $region1: #{_lambda_.1} parent=0
    #allocation2 [shape = 'u8[32768]{0}', space=vmem, size = 0x8000, scoped, tag = 'output window, operand 0']
    #allocation3 [shape = 's32[2]{0}', space=sflag, size = 0x8, scoped, tag = 'scoped memory for _lambda_.1']
    %8 = vsyncpa [#allocation3], 0
    %s9 = scalar_lea.sflag [#allocation3], 1
    %10 = vsyncpa %s9, 0
    loop: start=0, step=1, limit=4
    $region2: #{_lambda_.1} parent=1 // loop_pre_header
      _
    $region3: #{_lambda_.1} parent=1 // loop_header
      %s12 = sphi 0, %s16
      %p13 = scmp.ge.s32.totalorder %s12, 4
      %s22 = sphi 0, %s24
      %s25 = sphi 0, %s22
      %s26 = sphi 0, %s25
      %s42 = sphi 0, %s26
      %s46 = sphi 0, %s46
      %s48 = sphi 0, %s46
      %s49 = sphi 0, %s48
      %s63 = sphi 0, %s49
      %s67 = sphi 0, %s67
      %s69 = sphi 0, %s67
      %s70 = sphi 0, %s69
      %s84 = sphi 0, %s70
      %s90 = sphi 0, %s92
      %s93 = sphi 0, %s90
      %s94 = sphi 0, %s93
      %s110 = sphi 0, %s94
    $region4: #{_lambda_.1} parent=1 // loop_header_branch
      %15 = sbr.rel (%p13) target = $region8
    $region5: #{_lambda_.1} parent=1 // loop_body
      %s17 = ssub.s32 %s12, 1
      %s18 = ssub.s32 %s12, 2
      %s19 = sadd.s32 %s12, 1
      %s20 = ssub.s32 %s12, %s19
      %p21 = scmp.eq.s32.totalorder %s20, 0
      %s23 = sadd.s32 %s22, 1
      %s24 = scalar_select %p21, %s22, %s23
      %p27 = pneg %p21
      %p28 = scmp.eq.s32.totalorder %s12, 1
      %p29 = por %p27, %p28
      %p30 = scmp.ne.s32.totalorder %s22, %s25
      %p31 = scmp.eq.s32.totalorder %s12, 0
      %p32 = por %p30, %p31
      %p33 = scmp.ne.s32.totalorder %s22, %s25
      %p34 = scmp.eq.s32.totalorder %s17, 1
      %p35 = por %p33, %p34
      %p36 = scmp.ne.s32.totalorder %s25, %s26
      %p37 = scmp.eq.s32.totalorder %s17, 0
      %p38 = por %p36, %p37
      %p39 = scmp.ne.s32.totalorder %s25, %s26
      %p40 = scmp.eq.s32.totalorder %s18, 1
      %p41 = por %p39, %p40
      %p43 = scmp.ne.s32.totalorder %s26, %s42
      %p44 = scmp.eq.s32.totalorder %s18, 0
      %p45 = por %p43, %p44
      %s47 = sadd.s32 %s46, 1
      %p50 = scmp.eq.s32.totalorder %s12, 1
      %p51 = scmp.ne.s32.totalorder %s46, %s48
      %p52 = scmp.eq.s32.totalorder %s12, 0
      %p53 = por %p51, %p52
      %p54 = scmp.ne.s32.totalorder %s46, %s48
      %p55 = scmp.eq.s32.totalorder %s17, 1
      %p56 = por %p54, %p55
      %p57 = scmp.ne.s32.totalorder %s48, %s49
      %p58 = scmp.eq.s32.totalorder %s17, 0
      %p59 = por %p57, %p58
      %p60 = scmp.ne.s32.totalorder %s48, %s49
      %p61 = scmp.eq.s32.totalorder %s18, 1
      %p62 = por %p60, %p61
      %p64 = scmp.ne.s32.totalorder %s49, %s63
      %p65 = scmp.eq.s32.totalorder %s18, 0
      %p66 = por %p64, %p65
      %s68 = sadd.s32 %s67, 1
      %p71 = scmp.eq.s32.totalorder %s12, 1
      %p72 = scmp.ne.s32.totalorder %s67, %s69
      %p73 = scmp.eq.s32.totalorder %s12, 0
      %p74 = por %p72, %p73
      %p75 = scmp.ne.s32.totalorder %s67, %s69
      %p76 = scmp.eq.s32.totalorder %s17, 1
      %p77 = por %p75, %p76
      %p78 = scmp.ne.s32.totalorder %s69, %s70
      %p79 = scmp.eq.s32.totalorder %s17, 0
      %p80 = por %p78, %p79
      %p81 = scmp.ne.s32.totalorder %s69, %s70
      %p82 = scmp.eq.s32.totalorder %s18, 1
      %p83 = por %p81, %p82
      %p85 = scmp.ne.s32.totalorder %s70, %s84
      %p86 = scmp.eq.s32.totalorder %s18, 0
      %p87 = por %p85, %p86
      %s88 = ssub.s32 %s12, %s19
      %p89 = scmp.eq.s32.totalorder %s88, 0
      %s91 = sadd.s32 %s90, 1
      %s92 = scalar_select %p89, %s90, %s91
      %p95 = pneg %p89
      %p96 = scmp.eq.s32.totalorder %s12, 1
      %p97 = por %p95, %p96
      %p98 = scmp.ne.s32.totalorder %s90, %s93
      %p99 = scmp.eq.s32.totalorder %s12, 0
      %p100 = por %p98, %p99
      %p101 = scmp.ne.s32.totalorder %s90, %s93
      %p102 = scmp.eq.s32.totalorder %s17, 1
      %p103 = por %p101, %p102
      %p104 = scmp.ne.s32.totalorder %s93, %s94
      %p105 = scmp.eq.s32.totalorder %s17, 0
      %p106 = por %p104, %p105
      %p107 = scmp.ne.s32.totalorder %s93, %s94
      %p108 = scmp.eq.s32.totalorder %s18, 1
      %p109 = por %p107, %p108
      %p111 = scmp.ne.s32.totalorder %s94, %s110
      %p112 = scmp.eq.s32.totalorder %s18, 0
      %p113 = por %p111, %p112
      %p114 = scmp.le.s32.totalorder 1, %s12
      %p115 = scmp.lt.s32.totalorder %s12, 3
      %p116 = pnand %p114, %p115
      %p117 = pneg %p116
      // Predicated region
      $region9: #{_lambda_.1} parent=5 // pred_check
        _
      $region10: #{_lambda_.1} parent=5 // pred_check_branch
        %119 = sbr.rel (%p116) target = $region12
      $region11: #{_lambda_.1} parent=5 // pred_region
        %s120 = ssub.s32 %s12, 1
        // Predicated region
        $region13: #{_lambda_.1} parent=11 // pred_check
          %p121 = pneg %p59
        $region14: #{_lambda_.1} parent=11 // pred_check_branch
          %123 = sbr.rel (%p121) target = $region16
        $region15: #{_lambda_.1} parent=11 // pred_region
          _
        $region16: #{_lambda_.1} parent=11 // pred_fallthru
          _
        // Predicated region
        $region17: #{_lambda_.1} parent=11 // pred_check
          %p124 = pneg %p80
        $region18: #{_lambda_.1} parent=11 // pred_check_branch
          %126 = sbr.rel (%p124) target = $region20
        $region19: #{_lambda_.1} parent=11 // pred_region
          _
        $region20: #{_lambda_.1} parent=11 // pred_fallthru
          _
      $region12: #{_lambda_.1} parent=5 // pred_fallthru
        _
      %p127 = scmp.lt.s32.totalorder %s12, 2
      // Predicated region
      $region21: #{_lambda_.1} parent=5 // pred_check
        %p128 = pneg %p127
      $region22: #{_lambda_.1} parent=5 // pred_check_branch
        %130 = sbr.rel (%p128) target = $region24
      $region23: #{_lambda_.1} parent=5 // pred_region
        // Predicated region
        $region25: #{_lambda_.1} parent=23 // pred_check
          %p131 = pneg %p32
        $region26: #{_lambda_.1} parent=23 // pred_check_branch
          %133 = sbr.rel (%p131) target = $region28
        $region27: #{_lambda_.1} parent=23 // pred_region
          %s134 = smul.u32 4, %s12
          %p135 = scmp.lt.s32.totalorder %s134, 7
          %s136 = scalar_select %p135, %s134, 7
          %s137 = smul.addr %s136, 2
          %s138 = smul.addr %s137, 8
          %s139 = scalar_lea.vmem %s0, %s138
          %s140 = smul.u32 4, %s12
        $region28: #{_lambda_.1} parent=23 // pred_fallthru
          _
      $region24: #{_lambda_.1} parent=5 // pred_fallthru
        _
      %p141 = scmp.le.s32.totalorder 1, %s12
      %p142 = scmp.lt.s32.totalorder %s12, 3
      %p143 = pnand %p141, %p142
      %p144 = pneg %p143
      // Predicated region
      $region29: #{_lambda_.1} parent=5 // pred_check
        _
      $region30: #{_lambda_.1} parent=5 // pred_check_branch
        %146 = sbr.rel (%p143) target = $region32
      $region31: #{_lambda_.1} parent=5 // pred_region
        %s147 = ssub.s32 %s12, 1
        %s148 = smul.u32 4, %s17
        %p149 = scmp.lt.s32.totalorder %s148, 7
        %s150 = scalar_select %p149, %s148, 7
        %s151 = smul.addr %s150, 2
        %s152 = smul.addr %s151, 8
        %s153 = scalar_lea.vmem %s0, %s152
        %p154 = pneg %p38
        %p155 = pneg %p35
        %p156 = pneg %p59
        %p157 = pneg %p56
        %p158 = pneg %p80
        %p159 = pneg %p77
        %p160 = pneg %p106
        %p161 = pneg %p103
        %s162 = sand.u32 %s93, 1
        %s163 = scalar_lea.sflag [#allocation3], %s162
        %s164 = sand.u32 %s93, 1
        %s165 = smul.addr %s164, 32
        %s166 = scalar_lea.vmem [#allocation2], %s165
        %s167 = smul.u32 4, %s17
        %p168 = scmp.lt.s32.totalorder %s167, 7
        %s169 = scalar_select %p168, %s167, 7
        %s170 = smul.addr %s169, 2
        %s171 = smul.addr %s170, 8
        %s172 = scalar_lea.vmem %s0, %s171
        %s173 = smul.u32 4, %s17
        %s174 = smul.u32 4, %s17
        %v175 = vld [vmem:[%s172] sm:$0xff]
        %v176 = vld [vmem:[%s172 + $0x8] sm:$0xff]
        %v177 = vld [vmem:[%s172 + $0x10] sm:$0xff]
        %v178 = vld [vmem:[%s172 + $0x18] sm:$0xff]
        %v179 = vld [vmem:[%s172 + $0x20] sm:$0xff]
        %v180 = vld [vmem:[%s172 + $0x28] sm:$0xff]
        %v181 = vld [vmem:[%s172 + $0x30] sm:$0xff]
        %v182 = vld [vmem:[%s172 + $0x38] sm:$0xff]
        %v183 = vld [vmem:[%s1] sm:$0xff]
        %v184 = vld [vmem:[%s1 + $0x8] sm:$0xff]
        %v185 = vld [vmem:[%s1 + $0x10] sm:$0xff]
        %v186 = vld [vmem:[%s1 + $0x18] sm:$0xff]
        %v187 = vld [vmem:[%s1 + $0x20] sm:$0xff]
        %v188 = vld [vmem:[%s1 + $0x28] sm:$0xff]
        %v189 = vld [vmem:[%s1 + $0x30] sm:$0xff]
        %v190 = vld [vmem:[%s1 + $0x38] sm:$0xff]
        %v191 = vld [vmem:[%s1 + $0x40] sm:$0xff]
        %v192 = vld [vmem:[%s1 + $0x48] sm:$0xff]
        %v193 = vld [vmem:[%s1 + $0x50] sm:$0xff]
        %v194 = vld [vmem:[%s1 + $0x58] sm:$0xff]
        %v195 = vld [vmem:[%s1 + $0x60] sm:$0xff]
        %v196 = vld [vmem:[%s1 + $0x68] sm:$0xff]
        %v197 = vld [vmem:[%s1 + $0x70] sm:$0xff]
        %v198 = vld [vmem:[%s1 + $0x78] sm:$0xff]
        %v199 = vld [vmem:[%s1 + $0x80] sm:$0xff]
        %v200 = vld [vmem:[%s1 + $0x88] sm:$0xff]
        %v201 = vld [vmem:[%s1 + $0x90] sm:$0xff]
        %v202 = vld [vmem:[%s1 + $0x98] sm:$0xff]
        %v203 = vld [vmem:[%s1 + $0xa0] sm:$0xff]
        %v204 = vld [vmem:[%s1 + $0xa8] sm:$0xff]
        %v205 = vld [vmem:[%s1 + $0xb0] sm:$0xff]
        %v206 = vld [vmem:[%s1 + $0xb8] sm:$0xff]
        %v207 = vld [vmem:[%s2] sm:$0x1]
        %v209 = vlaneseq
        %v210 = vshrl.u32 %v209, 7
        %v211 = vsub.s32 0, %v210
        %v212 = vrot.slane %v207, %v211
        %vm214 = vcmask 523264
        %v216 = vsel %vm214, %v176, 0
        %v219 = vsel %vm214, %v178, 0
        %v222 = vsel %vm214, %v180, 0
        %v225 = vsel %vm214, %v182, 0
        %227 = vmatprep.subr.mxu0 0.0
        %228 = vmatpush1.msra.mxu0 %v183
        %229 = vmatprep.subr.mxu0 0.0
        %230 = vmatpush1.msra.mxu0 %v184
        %231 = vmatprep.subr.mxu0 0.0
        %232 = vmatpush1.msra.mxu0 %v185
        %233 = vmatprep.subr.mxu0 0.0
        %234 = vmatpush1.msra.mxu0 %v186
        %235 = vmatprep.subr.mxu0 0.0
        %236 = vmatpush1.msra.mxu0 %v187
        %237 = vmatprep.subr.mxu0 0.0
        %238 = vmatpush1.msra.mxu0 %v188
        %239 = vmatprep.subr.mxu0 0.0
        %240 = vmatpush1.msra.mxu0 %v189
        %241 = vmatprep.subr.mxu0 0.0
        %242 = vmatpush1.msra.mxu0 %v190
        %243 = vmatprep.subr.mxu0 0.0
        %244 = vmatpush1.msra.mxu0 %v191
        %245 = vmatprep.subr.mxu0 0.0
        %246 = vmatpush1.msra.mxu0 %v192
        %247 = vmatprep.subr.mxu0 0.0
        %248 = vmatpush1.msra.mxu0 %v193
        %249 = vmatprep.subr.mxu0 0.0
        %250 = vmatpush1.msra.mxu0 %v194
        %251 = vmatprep.subr.mxu0 0.0
        %252 = vmatpush1.msra.mxu0 %v195
        %253 = vmatprep.subr.mxu0 0.0
        %254 = vmatpush1.msra.mxu0 %v196
        %255 = vmatprep.subr.mxu0 0.0
        %256 = vmatpush1.msra.mxu0 %v197
        %257 = vmatprep.subr.mxu0 0.0
        %258 = vmatpush1.msra.mxu0 %v198
        %259 = vmatprep.subr.mxu0 0.0
        %260 = vmatpush1.msra.mxu0 %v199
        %261 = vmatprep.subr.mxu0 0.0
        %262 = vmatpush1.msra.mxu0 %v200
        %263 = vmatprep.subr.mxu0 0.0
        %264 = vmatpush1.msra.mxu0 %v201
        %265 = vmatprep.subr.mxu0 0.0
        %266 = vmatpush1.msra.mxu0 %v202
        %267 = vmatprep.subr.mxu0 0.0
        %268 = vmatpush1.msra.mxu0 %v203
        %269 = vmatprep.subr.mxu0 0.0
        %270 = vmatpush1.msra.mxu0 %v204
        %271 = vmatprep.subr.mxu0 0.0
        %272 = vmatpush1.msra.mxu0 %v205
        %273 = vmatprep.subr.mxu0 0.0
        %274 = vmatpush1.msra.mxu0 %v206
        %275 = vmatprep.subr.mxu0 0.0
        %276 = vmatpush1.msra.mxu0 0.0
        %277 = vmatprep.subr.mxu0 0.0
        %278 = vmatpush1.msra.mxu0 0.0
        %279 = vmatprep.subr.mxu0 0.0
        %280 = vmatpush1.msra.mxu0 0.0
        %281 = vmatprep.subr.mxu0 0.0
        %282 = vmatpush1.msra.mxu0 0.0
        %283 = vmatprep.subr.mxu0 0.0
        %284 = vmatpush1.msra.mxu0 0.0
        %285 = vmatprep.subr.mxu0 0.0
        %286 = vmatpush1.msra.mxu0 0.0
        %287 = vmatprep.subr.mxu0 0.0
        %288 = vmatpush1.msra.mxu0 0.0
        %289 = vmatprep.subr.mxu0 0.0
        %290 = vmatpush1.msra.mxu0 0.0
        %291 = vmatprep.mubr.f32.mxu0 %v216
        %292 = vmatmul.mubr.f32.gmra.mrb[0].mxu0 %v175
        %v293 = vpop.f32.mrb[0].mxu0
        %v294 = vadd.f32 %v212, %v293
        %v295 = vpop.f32.mrb[0].mxu0
        %296 = vmatprep.mubr.f32.mxu0 %v219
        %297 = vmatmul.mubr.f32.gmra.mrb[0].mxu0 %v177
        %v298 = vpop.f32.mrb[0].mxu0
        %v299 = vadd.f32 %v212, %v298
        %v300 = vpop.f32.mrb[0].mxu0
        %301 = vmatprep.mubr.f32.mxu0 %v222
        %302 = vmatmul.mubr.f32.gmra.mrb[0].mxu0 %v179
        %v303 = vpop.f32.mrb[0].mxu0
        %v304 = vadd.f32 %v212, %v303
        %v305 = vpop.f32.mrb[0].mxu0
        %306 = vmatprep.mubr.f32.mxu0 %v225
        %307 = vmatmul.mubr.f32.gmra.mrb[0].mxu0 %v181
        %v308 = vpop.f32.mrb[0].mxu0
        %v309 = vadd.f32 %v212, %v308
        %v310 = vpop.f32.mrb[0].mxu0
        %311 = vdwg.mxu0
        %312 = vst [vmem:[%s166] sm:$0xff] %v294
        %313 = vst [vmem:[%s166 + $0x8] sm:$0xff] %v299
        %314 = vst [vmem:[%s166 + $0x10] sm:$0xff] %v304
        %315 = vst [vmem:[%s166 + $0x18] sm:$0xff] %v309
        %s316 = sand.u32 %s93, 1
        %s317 = scalar_lea.sflag [#allocation3], %s316
        %s318 = sand.u32 %s93, 1
        %s319 = smul.addr %s318, 32
        %s320 = scalar_lea.vmem [#allocation2], %s319
        // Predicated region
        $region33: #{_lambda_.1} parent=31 // pred_check
          %p321 = pneg %p103
        $region34: #{_lambda_.1} parent=31 // pred_check_branch
          %323 = sbr.rel (%p321) target = $region36
        $region35: #{_lambda_.1} parent=31 // pred_region
          %s324 = smul.u32 4, %s17
          %s326 = ssub.s32 512, 512
          %327 = vsyncadd %s317, %s326
          %s328 = smul.addr %s324, 128
          %s329 = scalar_lea.hbm %s3, %s328
          %s330 = sshll.u32 %s320, 4
          %s331 = int_to_ptr.vmem [resolvable:$true] %s330
          %336 = dma.vmem_to_hbm [thread:$0]  %s331, 512, %s329, %s317, 128, 128, 8
        $region36: #{_lambda_.1} parent=31 // pred_fallthru
          _
      $region32: #{_lambda_.1} parent=5 // pred_fallthru
        _
      %p337 = scmp.le.s32.totalorder 2, %s12
      // Predicated region
      $region37: #{_lambda_.1} parent=5 // pred_check
        %p338 = pneg %p337
      $region38: #{_lambda_.1} parent=5 // pred_check_branch
        %340 = sbr.rel (%p338) target = $region40
      $region39: #{_lambda_.1} parent=5 // pred_region
        %s341 = ssub.s32 %s12, 2
        // Predicated region
        $region41: #{_lambda_.1} parent=39 // pred_check
          %p342 = pneg %p109
        $region42: #{_lambda_.1} parent=39 // pred_check_branch
          %344 = sbr.rel (%p342) target = $region44
        $region43: #{_lambda_.1} parent=39 // pred_region
          %s345 = sand.u32 %s94, 1
          %s346 = scalar_lea.sflag [#allocation3], %s345
          %s347 = sand.u32 %s94, 1
          %s348 = smul.addr %s347, 32
          %s349 = scalar_lea.vmem [#allocation2], %s348
          %350 = dma.done %s346, 512
        $region44: #{_lambda_.1} parent=39 // pred_fallthru
          _
      $region40: #{_lambda_.1} parent=5 // pred_fallthru
        _
    $region6: #{_lambda_.1} parent=1 // loop_footer
      %s16 = sadd.s32 1, %s12
    $region7: #{_lambda_.1} parent=1 // loop_footer_branch
      %11 = sbr.rel target = $region3
    $region8: #{_lambda_.1} parent=1 // loop_exit
      _
    %351 = vsyncpa [#allocation3], 1
    %s352 = scalar_lea.sflag [#allocation3], 1
    %353 = vsyncpa %s352, 1

</llo_original>
